<compile_context>
chip_gen: v6e
topology: v6e:2x2x1
jax: 0.10.0
libtpu: 0.0.40
codegen_flags: <defaults>
</compile_context>

<pallas_src>
import functools
import math

import jax
import jax.numpy as jnp
from jax.experimental import pallas as pl
from jax.experimental.pallas import tpu as pltpu

_INV_SQRT2 = 1.0 / math.sqrt(2.0)
_MiB = 1024 * 1024


def mlp_kernel(x_ref, w1_ref, b1_ref, w2_ref, b2_ref, o_ref, acc_ref, *,
               n_sub, tc, matmul_dtype):
    """One (row-tile, hidden-tile) step of the fused MLP.

    x_ref:  (tm, C)   input rows (original dtype, cast to bf16 in-kernel)
    w1_ref: (C, tH)   c_fc weight tile (bf16)
    b1_ref: (1, tH)   c_fc bias tile (f32)
    w2_ref: (tH, C)   c_proj weight tile (bf16)
    b2_ref: (1, C)    c_proj bias (f32, resident)
    o_ref:  (tm, C)   output tile
    acc_ref:(tm, C)   f32 accumulator scratch (persists across the H axis)
    """
    h_idx = pl.program_id(1)
    n_h = pl.num_programs(1)

    @pl.when(h_idx == 0)
    def _():
        acc_ref[...] = jnp.zeros_like(acc_ref)

    # In-kernel f32 -> bf16 cast of the row tile (VPU filler hidden under the
    # MXU); avoids a separate XLA pre-pass over x in HBM.
    xb = x_ref[...].astype(matmul_dtype)

    # Split the tH block into n_sub independent chunks so the scheduler can
    # overlap chunk k+1's c_fc matmul (MXU) with chunk k's bias + erf GELU
    # (VPU/EUP) and its c_proj partial accumulate. Static slices -> no copies.
    for k in range(n_sub):
        lo, hi = k * tc, (k + 1) * tc
        hk = jnp.dot(xb, w1_ref[:, lo:hi],
                     preferred_element_type=jnp.float32)
        hk = hk + b1_ref[:, lo:hi]
        # Exact GELU (PyTorch nn.GELU() default, approximate='none'):
        # 0.5 * x * (1 + erf(x / sqrt(2))), computed in f32.
        # TODO(synk): a bf16 GELU would halve VALU pressure on v6e/v7x, but
        # bf16 erf lowering is not guaranteed in Mosaic, so keep f32.
        gk = 0.5 * hk * (1.0 + jax.lax.erf(hk * _INV_SQRT2))
        acc_ref[...] += jnp.dot(gk.astype(matmul_dtype), w2_ref[lo:hi, :],
                                preferred_element_type=jnp.float32)

    @pl.when(h_idx == n_h - 1)
    def _():
        # Dropout: inference / p=0.0 -> identity (PyTorch dropout no-op in eval).
        # TODO(synk): training-mode dropout (p > 0) would use pltpu.prng_seed +
        # pltpu.prng_random_bits to build the keep mask in-kernel.
        o_ref[...] = (acc_ref[...] + b2_ref[...]).astype(o_ref.dtype)


def _tpu_vmem_capacity_bytes():
    """Best-effort per-core VMEM capacity (falls back by device generation)."""
    vmem = None
    try:
        info = pltpu.get_tpu_info()
        vmem = getattr(info, "vmem_capacity_bytes", None)
    except Exception:
        vmem = None
    if vmem:
        return int(vmem)
    kind = ""
    try:
        kind = jax.devices()[0].device_kind.lower()
    except Exception:
        pass
    # v7x: 64 MiB per TensorCore; v2-v6: 128 MiB.
    return 64 * _MiB if "v7" in kind else 128 * _MiB


def _choose_sub_chunk(tH):
    """Split a tH hidden block into 4 or 2 chunks (>=256 wide, lane aligned)."""
    for n in (4, 2):
        tc = tH // n
        if tH % n == 0 and tc >= 256 and tc % 128 == 0:
            return tc
    return tH


def _estimate_vmem(tm, C, tH, num_h, x_bytes, out_bytes, tc, wb):
    """Honest VMEM estimate for one pipelined step (bytes)."""
    wbufs = 1 if num_h == 1 else 2                  # resident vs double-buffered
    est = wbufs * ((C * tH + tH * C) * wb + tH * 4)  # weight tiles + b_fc tile
    est += C * 4                                     # resident b_proj
    est += 2 * tm * C * x_bytes                      # x tile (double buffered)
    est += 2 * tm * C * out_bytes                    # out tile (double buffered)
    est += tm * C * 4                                # f32 accumulator scratch
    est += tm * C * wb                               # bf16 copy of x tile
    est += 2 * tm * tc * (4 + 4 + wb)                # hidden/GELU f32 + bf16 copy
    return est


def _choose_h_tiling(C, H, tm, budget, x_bytes, out_bytes, wb):
    """Largest hidden-tile tH (divisor of H, multiple of 128) fitting budget."""
    cands = [H] + [d for d in range(H - 128, 255, -128) if H % d == 0]
    fallback = None
    for tH in cands:
        tc = _choose_sub_chunk(tH)
        fallback = (tH, tc)
        if _estimate_vmem(tm, C, tH, H // tH, x_bytes, out_bytes, tc, wb) <= budget:
            return tH, tc
    return fallback


def mlp_pallas(x, w_fc, b_fc, w_proj, b_proj, *, tm=None,
               matmul_dtype=jnp.bfloat16):
    """x: (B, T, C). w_fc: (C, 4C), b_fc: (4C,), w_proj: (4C, C), b_proj: (C,).

    Pass w_fc / w_proj already in bf16 to avoid a per-call cast pass.
    """
    B, T, C = x.shape
    H = w_fc.shape[1]
    M = B * T
    out_dtype = x.dtype

    # Generation-aware VMEM budget: leave headroom for compiler scratch and
    # semaphores. ~110 MiB on 128-MiB parts (v5e/v6e), ~48 MiB on v7x.
    vmem_cap = _tpu_vmem_capacity_bytes()
    budget = max(32 * _MiB, min(vmem_cap - 16 * _MiB, 110 * _MiB))

    if tm is None:
        tm = 512 if budget >= 96 * _MiB else 256
    tm = min(tm, M)
    if tm < M and tm % 8 != 0:
        tm = max(8, (tm // 8) * 8)
    # Note: when M % tm != 0 the last tile is partial; Pallas masks the partial
    # output store, so padded rows never reach HBM (correct but slower stores).

    wb = jnp.dtype(matmul_dtype).itemsize
    x_bytes = jnp.dtype(x.dtype).itemsize
    out_bytes = jnp.dtype(out_dtype).itemsize

    tH, tc = _choose_h_tiling(C, H, tm, budget, x_bytes, out_bytes, wb)
    num_h = H // tH
    n_sub = tH // tc

    # x stays in its input dtype; the bf16 cast happens inside the kernel.
    x2d = x.reshape(M, C)
    # No-op casts if the caller already passes bf16 weights.
    w1 = w_fc.astype(matmul_dtype)
    w2 = w_proj.astype(matmul_dtype)
    b1 = b_fc.reshape(1, H).astype(jnp.float32)
    b2 = b_proj.reshape(1, C).astype(jnp.float32)

    est = _estimate_vmem(tm, C, tH, num_h, x_bytes, out_bytes, tc, wb)
    vmem_limit = int(max(32 * _MiB, min(est + 8 * _MiB, budget)))

    flops = 4 * M * C * H                            # the two matmuls
    bytes_accessed = (M * C * x_bytes                # x read
                      + (C * H + H * C) * wb         # weights read (once)
                      + (H + C) * 4                  # biases read
                      + M * C * out_bytes)           # output write
    cost = pl.CostEstimate(flops=flops, transcendentals=M * H,
                           bytes_accessed=bytes_accessed)

    resident = pl.Buffered(1)
    if num_h == 1:
        # Constant index maps -> fetch once and keep resident (halves weight VMEM).
        w1_spec = pl.BlockSpec((C, tH), lambda i, h: (0, 0), pipeline_mode=resident)
        b1_spec = pl.BlockSpec((1, tH), lambda i, h: (0, 0), pipeline_mode=resident)
        w2_spec = pl.BlockSpec((tH, C), lambda i, h: (0, 0), pipeline_mode=resident)
    else:
        # H-tiled path (large C on small-VMEM parts): stream weight tiles.
        w1_spec = pl.BlockSpec((C, tH), lambda i, h: (0, h))
        b1_spec = pl.BlockSpec((1, tH), lambda i, h: (0, h))
        w2_spec = pl.BlockSpec((tH, C), lambda i, h: (h, 0))
    b2_spec = pl.BlockSpec((1, C), lambda i, h: (0, 0), pipeline_mode=resident)

    kernel = functools.partial(mlp_kernel, n_sub=n_sub, tc=tc,
                               matmul_dtype=matmul_dtype)

    out2d = pl.pallas_call(
        kernel,
        out_shape=jax.ShapeDtypeStruct((M, C), out_dtype),
        grid_spec=pltpu.PrefetchScalarGridSpec(
            num_scalar_prefetch=0,
            grid=(pl.cdiv(M, tm), num_h),            # reduction (H) axis last
            in_specs=[
                pl.BlockSpec((tm, C), lambda i, h: (i, 0)),   # x row tile
                w1_spec,                                      # c_fc weight tile
                b1_spec,                                      # c_fc bias tile
                w2_spec,                                      # c_proj weight tile
                b2_spec,                                      # c_proj bias
            ],
            out_specs=pl.BlockSpec((tm, C), lambda i, h: (i, 0)),
            scratch_shapes=[pltpu.VMEM((tm, C), jnp.float32)],
        ),
        compiler_params=pltpu.CompilerParams(
            dimension_semantics=("parallel", "arbitrary"),
            vmem_limit_bytes=vmem_limit,
        ),
        cost_estimate=cost,
    )(x2d, w1, b1, w2, b2)
    return out2d.reshape(B, T, C)


if __name__ == "__main__":
    # Small correctness-check config (NOT a benchmark shape): n_embed=128 keeps
    # every lane dimension a multiple of 128 (dense vreg stores); bias=True,
    # dropout=0.0 (inference).
    B, T, C = 2, 8, 128
    H = 4 * C

    key = jax.random.PRNGKey(0)
    kx, k1, k2, k3, k4 = jax.random.split(key, 5)
    x = jax.random.normal(kx, (B, T, C), dtype=jnp.float32)
    # Deterministic parameter init (approximates PyTorch Linear default scale).
    w_fc = jax.random.normal(k1, (C, H), dtype=jnp.float32) * (1.0 / math.sqrt(C))
    b_fc = jax.random.normal(k2, (H,), dtype=jnp.float32) * 0.02
    w_proj = jax.random.normal(k3, (H, C), dtype=jnp.float32) * (1.0 / math.sqrt(H))
    b_proj = jax.random.normal(k4, (C,), dtype=jnp.float32) * 0.02

    # Persist the MXU-side weights in bf16 once, outside the per-call path.
    w_fc_bf16 = w_fc.astype(jnp.bfloat16)
    w_proj_bf16 = w_proj.astype(jnp.bfloat16)

    out = mlp_pallas(x, w_fc_bf16, b_fc, w_proj_bf16, b_proj)
    jax.block_until_ready(out)

    # Pure-JAX f32 reference. The kernel feeds bf16 operands into the MXU
    # (f32 accumulation), so tolerances are loosened accordingly.
    h_ref = x.reshape(-1, C) @ w_fc + b_fc
    g_ref = 0.5 * h_ref * (1.0 + jax.lax.erf(h_ref * _INV_SQRT2))
    o_ref = (g_ref @ w_proj + b_proj).reshape(B, T, C)
    assert jnp.allclose(out, o_ref, atol=3e-2, rtol=3e-2), "mismatch vs reference"

    print("KERNEL_OK")
</pallas_src>

<mosaic_0001>
module attributes {stable_mosaic.version = 11 : i64} {
  func.func @mlp_kernel(%arg0: i32, %arg1: i32, %arg2: memref<16x128xf32, #tpu.memory_space<vmem>>, %arg3: memref<128x512xbf16, #tpu.memory_space<vmem>>, %arg4: memref<1x512xf32, #tpu.memory_space<vmem>>, %arg5: memref<512x128xbf16, #tpu.memory_space<vmem>>, %arg6: memref<1x128xf32, #tpu.memory_space<vmem>>, %arg7: memref<16x128xf32, #tpu.memory_space<vmem>>, %arg8: memref<16x128xf32, #tpu.memory_space<vmem>>) attributes {dimension_semantics = [#tpu.dimension_semantics<parallel>, #tpu.dimension_semantics<arbitrary>], iteration_bounds = array<i64: 1, 1>, scalar_prefetch = 0 : i64, scratch_operands = 1 : i64, tpu.core_type = #tpu.core_type<tc>, window_params = [{transform_indices = @transform_0, window_bounds = array<i64: 16, 128>}, {pipeline_mode = #tpu.pipeline_mode<synchronous>, transform_indices = @transform_1, window_bounds = array<i64: 128, 512>}, {pipeline_mode = #tpu.pipeline_mode<synchronous>, transform_indices = @transform_2, window_bounds = array<i64: 1, 512>}, {pipeline_mode = #tpu.pipeline_mode<synchronous>, transform_indices = @transform_3, window_bounds = array<i64: 512, 128>}, {pipeline_mode = #tpu.pipeline_mode<synchronous>, transform_indices = @transform_4, window_bounds = array<i64: 1, 128>}, {transform_indices = @transform_5, window_bounds = array<i64: 16, 128>}]} {
    %c0_i32 = arith.constant 0 : i32
    %0 = arith.cmpi eq, %arg1, %c0_i32 : i32
    %1 = arith.extui %0 : i1 to i32
    %c0_i32_0 = arith.constant 0 : i32
    %2 = arith.cmpi ne, %1, %c0_i32_0 : i32
    scf.if %2 {
      %cst_32 = arith.constant 0.000000e+00 : f32
      %46 = vector.broadcast %cst_32 : f32 to vector<16x128xf32>
      %c0_33 = arith.constant 0 : index
      %c0_34 = arith.constant 0 : index
      %47 = vector.load %arg8[%c0_33, %c0_34] : memref<16x128xf32, #tpu.memory_space<vmem>>, vector<16x128xf32>
      tpu.vector_store %arg8[%c0_33, %c0_34], %46 {strides = array<i32>} : memref<16x128xf32, #tpu.memory_space<vmem>>, vector<16x128xf32>,
    } else {
    }
    %c0 = arith.constant 0 : index
    %c0_1 = arith.constant 0 : index
    %3 = vector.load %arg2[%c0, %c0_1] : memref<16x128xf32, #tpu.memory_space<vmem>>, vector<16x128xf32>
    %4 = arith.truncf %3 : vector<16x128xf32> to vector<16x128xbf16>
    %c0_2 = arith.constant 0 : index
    %c0_3 = arith.constant 0 : index
    %5 = vector.load %arg3[%c0_2, %c0_3] : memref<128x512xbf16, #tpu.memory_space<vmem>>, vector<128x256xbf16>
    %cst = arith.constant dense<0.000000e+00> : vector<16x256xf32>
    %6 = tpu.matmul %4, %5, %cst {dimension_numbers = #tpu.dot_dimension_numbers<[1], [0], [0], [1], [0, 0, 1, 1], [], []>} : vector<16x128xbf16>, vector<128x256xbf16>, vector<16x256xf32> -> vector<16x256xf32>
    %c0_4 = arith.constant 0 : index
    %c0_5 = arith.constant 0 : index
    %7 = vector.load %arg4[%c0_4, %c0_5] : memref<1x512xf32, #tpu.memory_space<vmem>>, vector<1x256xf32>
    %8 = vector.broadcast %7 : vector<1x256xf32> to vector<16x256xf32>
    %9 = arith.addf %6, %8 : vector<16x256xf32>
    %cst_6 = arith.constant 5.000000e-01 : f32
    %10 = vector.broadcast %cst_6 : f32 to vector<16x256xf32>
    %11 = arith.mulf %10, %9 : vector<16x256xf32>
    %cst_7 = arith.constant 0.707106769 : f32
    %12 = vector.broadcast %cst_7 : f32 to vector<16x256xf32>
    %13 = arith.mulf %9, %12 : vector<16x256xf32>
    %14 = math.erf %13 : vector<16x256xf32>
    %cst_8 = arith.constant 1.000000e+00 : f32
    %15 = vector.broadcast %cst_8 : f32 to vector<16x256xf32>
    %16 = arith.addf %15, %14 : vector<16x256xf32>
    %17 = arith.mulf %11, %16 : vector<16x256xf32>
    %c0_9 = arith.constant 0 : index
    %c0_10 = arith.constant 0 : index
    %18 = vector.load %arg8[%c0_9, %c0_10] : memref<16x128xf32, #tpu.memory_space<vmem>>, vector<16x128xf32>
    %19 = arith.truncf %17 : vector<16x256xf32> to vector<16x256xbf16>
    %c0_11 = arith.constant 0 : index
    %c0_12 = arith.constant 0 : index
    %20 = vector.load %arg5[%c0_11, %c0_12] : memref<512x128xbf16, #tpu.memory_space<vmem>>, vector<256x128xbf16>
    %cst_13 = arith.constant dense<0.000000e+00> : vector<16x128xf32>
    %21 = tpu.matmul %19, %20, %cst_13 {dimension_numbers = #tpu.dot_dimension_numbers<[1], [0], [0], [1], [0, 0, 1, 1], [], []>} : vector<16x256xbf16>, vector<256x128xbf16>, vector<16x128xf32> -> vector<16x128xf32>
    %22 = arith.addf %18, %21 : vector<16x128xf32>
    %c0_14 = arith.constant 0 : index
    %c0_15 = arith.constant 0 : index
    %23 = vector.load %arg8[%c0_14, %c0_15] : memref<16x128xf32, #tpu.memory_space<vmem>>, vector<16x128xf32>
    tpu.vector_store %arg8[%c0_14, %c0_15], %22 {strides = array<i32>} : memref<16x128xf32, #tpu.memory_space<vmem>>, vector<16x128xf32>,
    %c0_16 = arith.constant 0 : index
    %c256 = arith.constant 256 : index
    %24 = vector.load %arg3[%c0_16, %c256] : memref<128x512xbf16, #tpu.memory_space<vmem>>, vector<128x256xbf16>
    %cst_17 = arith.constant dense<0.000000e+00> : vector<16x256xf32>
    %25 = tpu.matmul %4, %24, %cst_17 {dimension_numbers = #tpu.dot_dimension_numbers<[1], [0], [0], [1], [0, 0, 1, 1], [], []>} : vector<16x128xbf16>, vector<128x256xbf16>, vector<16x256xf32> -> vector<16x256xf32>
    %c0_18 = arith.constant 0 : index
    %c256_19 = arith.constant 256 : index
    %26 = vector.load %arg4[%c0_18, %c256_19] : memref<1x512xf32, #tpu.memory_space<vmem>>, vector<1x256xf32>
    %27 = vector.broadcast %26 : vector<1x256xf32> to vector<16x256xf32>
    %28 = arith.addf %25, %27 : vector<16x256xf32>
    %cst_20 = arith.constant 5.000000e-01 : f32
    %29 = vector.broadcast %cst_20 : f32 to vector<16x256xf32>
    %30 = arith.mulf %29, %28 : vector<16x256xf32>
    %cst_21 = arith.constant 0.707106769 : f32
    %31 = vector.broadcast %cst_21 : f32 to vector<16x256xf32>
    %32 = arith.mulf %28, %31 : vector<16x256xf32>
    %33 = math.erf %32 : vector<16x256xf32>
    %cst_22 = arith.constant 1.000000e+00 : f32
    %34 = vector.broadcast %cst_22 : f32 to vector<16x256xf32>
    %35 = arith.addf %34, %33 : vector<16x256xf32>
    %36 = arith.mulf %30, %35 : vector<16x256xf32>
    %c0_23 = arith.constant 0 : index
    %c0_24 = arith.constant 0 : index
    %37 = vector.load %arg8[%c0_23, %c0_24] : memref<16x128xf32, #tpu.memory_space<vmem>>, vector<16x128xf32>
    %38 = arith.truncf %36 : vector<16x256xf32> to vector<16x256xbf16>
    %c256_25 = arith.constant 256 : index
    %c0_26 = arith.constant 0 : index
    %39 = vector.load %arg5[%c256_25, %c0_26] : memref<512x128xbf16, #tpu.memory_space<vmem>>, vector<256x128xbf16>
    %cst_27 = arith.constant dense<0.000000e+00> : vector<16x128xf32>
    %40 = tpu.matmul %38, %39, %cst_27 {dimension_numbers = #tpu.dot_dimension_numbers<[1], [0], [0], [1], [0, 0, 1, 1], [], []>} : vector<16x256xbf16>, vector<256x128xbf16>, vector<16x128xf32> -> vector<16x128xf32>
    %41 = arith.addf %37, %40 : vector<16x128xf32>
    %c0_28 = arith.constant 0 : index
    %c0_29 = arith.constant 0 : index
    %42 = vector.load %arg8[%c0_28, %c0_29] : memref<16x128xf32, #tpu.memory_space<vmem>>, vector<16x128xf32>
    tpu.vector_store %arg8[%c0_28, %c0_29], %41 {strides = array<i32>} : memref<16x128xf32, #tpu.memory_space<vmem>>, vector<16x128xf32>,
    %c0_i32_30 = arith.constant 0 : i32
    %43 = arith.cmpi eq, %arg1, %c0_i32_30 : i32
    %44 = arith.extui %43 : i1 to i32
    %c0_i32_31 = arith.constant 0 : i32
    %45 = arith.cmpi ne, %44, %c0_i32_31 : i32
    scf.if %45 {
      %c0_32 = arith.constant 0 : index
      %c0_33 = arith.constant 0 : index
      %46 = vector.load %arg8[%c0_32, %c0_33] : memref<16x128xf32, #tpu.memory_space<vmem>>, vector<16x128xf32>
      %c0_34 = arith.constant 0 : index
      %c0_35 = arith.constant 0 : index
      %47 = vector.load %arg6[%c0_34, %c0_35] : memref<1x128xf32, #tpu.memory_space<vmem>>, vector<1x128xf32>
      %48 = vector.broadcast %47 : vector<1x128xf32> to vector<16x128xf32>
      %49 = arith.addf %46, %48 : vector<16x128xf32>
      %c0_36 = arith.constant 0 : index
      %c0_37 = arith.constant 0 : index
      %50 = vector.load %arg7[%c0_36, %c0_37] : memref<16x128xf32, #tpu.memory_space<vmem>>, vector<16x128xf32>
      tpu.vector_store %arg7[%c0_36, %c0_37], %49 {strides = array<i32>} : memref<16x128xf32, #tpu.memory_space<vmem>>, vector<16x128xf32>,
    } else {
    }
    return
  }
  func.func @transform_0(%arg0: i32, %arg1: i32) -> (i32, i32) {
    %c0_i32 = arith.constant 0 : i32
    %c0_i32_0 = arith.constant 0 : i32
    return %arg0, %c0_i32 : i32, i32
  }
  func.func @transform_1(%arg0: i32, %arg1: i32) -> (i32, i32) {
    %c0_i32 = arith.constant 0 : i32
    %c0_i32_0 = arith.constant 0 : i32
    %c0_i32_1 = arith.constant 0 : i32
    return %c0_i32, %c0_i32_0 : i32, i32
  }
  func.func @transform_2(%arg0: i32, %arg1: i32) -> (i32, i32) {
    %c0_i32 = arith.constant 0 : i32
    %c0_i32_0 = arith.constant 0 : i32
    %c0_i32_1 = arith.constant 0 : i32
    return %c0_i32, %c0_i32_0 : i32, i32
  }
  func.func @transform_3(%arg0: i32, %arg1: i32) -> (i32, i32) {
    %c0_i32 = arith.constant 0 : i32
    %c0_i32_0 = arith.constant 0 : i32
    %c0_i32_1 = arith.constant 0 : i32
    return %c0_i32, %c0_i32_0 : i32, i32
  }
  func.func @transform_4(%arg0: i32, %arg1: i32) -> (i32, i32) {
    %c0_i32 = arith.constant 0 : i32
    %c0_i32_0 = arith.constant 0 : i32
    %c0_i32_1 = arith.constant 0 : i32
    return %c0_i32, %c0_i32_0 : i32, i32
  }
  func.func @transform_5(%arg0: i32, %arg1: i32) -> (i32, i32) {
    %c0_i32 = arith.constant 0 : i32
    %c0_i32_0 = arith.constant 0 : i32
    return %arg0, %c0_i32 : i32, i32
  }
}

</mosaic_0001>

<llo_original>
// kernel: tpu_custom_call.1
$region0: #{tpu_custom_call.1}
  #allocation0 [shape = 'u32[]', space=smem, size = 0x4, offset = 0x4, fixed_abs, tag = 'smem constant byte address 0x4 - core index']
  #allocation1 [shape = 'u32[144,128]{1,0:T(1,128)}', space=vmem, size = 0x12000, scoped, tag = 'internal scratch']
  #allocation2 [shape = 'f32[16,128]{1,0:T(8,128)}', space=vmem, size = 0x2000, scoped, tag = 'scratch operand']
  %s0 = inlined_call_operand.hbm [shape: f32[16,128], index: 0, kind: input, shape index: {}]
  %s1 = inlined_call_operand.hbm [shape: bf16[128,512], index: 1, kind: input, shape index: {}]
  %s2 = inlined_call_operand.hbm [shape: f32[1,512], index: 2, kind: input, shape index: {}]
  %s3 = inlined_call_operand.hbm [shape: bf16[512,128], index: 3, kind: input, shape index: {}]
  %s4 = inlined_call_operand.vmem [shape: f32[1,128], index: 4, kind: input, shape index: {}]
  %s5 = inlined_call_operand.hbm [shape: f32[16,128], index: 5, kind: output, shape index: {}]
  %s6 = sld [smem:[#allocation0]]
  $region54: #{tpu_custom_call.1} parent=0
    _
  %s8 = ssub.s32 1, %s6
  %s9 = scalar_select 0, %s8, %s6
  $region1: #{tpu_custom_call.1} parent=0
    #allocation3 [shape = 'u8[8192]{0}', space=vmem, size = 0x2000, scoped, tag = 'input window, operand 0, single buffered']
    #allocation4 [shape = 's32[1]{0}', space=sflag, size = 0x4, scoped, tag = 'scoped memory for tpu_custom_call.1']
    #allocation5 [shape = 's32[1]{0}', space=sflag, size = 0x4, scoped, tag = 'scoped memory for tpu_custom_call.1']
    #allocation6 [shape = 'u8[131072]{0}', space=vmem, size = 0x20000, scoped, tag = 'input window, operand 1, single buffered']
    #allocation7 [shape = 's32[1]{0}', space=sflag, size = 0x4, scoped, tag = 'scoped memory for tpu_custom_call.1']
    #allocation8 [shape = 'u8[2048]{0}', space=vmem, size = 0x800, scoped, tag = 'input window, operand 2, single buffered']
    #allocation9 [shape = 'u8[131072]{0}', space=vmem, size = 0x20000, scoped, tag = 'input window, operand 3, single buffered']
    #allocation10 [shape = 's32[1]{0}', space=sflag, size = 0x4, scoped, tag = 'scoped memory for tpu_custom_call.1']
    #allocation11 [shape = 'u8[8192]{0}', space=vmem, size = 0x2000, scoped, tag = 'output window, operand 0, single buffered']
    %10 = vsyncpa [#allocation4], 0
    %11 = vsyncpa [#allocation7], 0
    %12 = vsyncpa [#allocation10], 0
    %13 = vsyncpa [#allocation5], 0
    // Predicated region
    $region2: #{tpu_custom_call.1} parent=1 // pred_check
      _
    $region3: #{tpu_custom_call.1} parent=1 // pred_check_branch
      %15 = sbr.rel (0) target = $region5
    $region4: #{tpu_custom_call.1} parent=1 // pred_region
      %s17 = ssub.s32 256, 256
      %18 = vsyncadd [#allocation4], %s17
      %s19 = sshll.u32 [#allocation3], 4
      %s20 = int_to_ptr.vmem [resolvable:$true] %s19
      %25 = dma.hbm_to_vmem [thread:$0]  %s0, 256, %s20, [#allocation4], 128, 128, 8
    $region5: #{tpu_custom_call.1} parent=1 // pred_fallthru
      _
    // Predicated region
    $region6: #{tpu_custom_call.1} parent=1 // pred_check
      _
    $region7: #{tpu_custom_call.1} parent=1 // pred_check_branch
      %27 = sbr.rel (0) target = $region9
    $region8: #{tpu_custom_call.1} parent=1 // pred_region
      %s29 = ssub.s32 4096, 4096
      %30 = vsyncadd [#allocation7], %s29
      %s31 = sshll.u32 [#allocation6], 4
      %s32 = int_to_ptr.vmem [resolvable:$true] %s31
      %37 = dma.hbm_to_vmem [thread:$0]  %s1, 4096, %s32, [#allocation7], 256, 256, 16
    $region9: #{tpu_custom_call.1} parent=1 // pred_fallthru
      _
    // Predicated region
    $region10: #{tpu_custom_call.1} parent=1 // pred_check
      _
    $region11: #{tpu_custom_call.1} parent=1 // pred_check_branch
      %39 = sbr.rel (0) target = $region13
    $region12: #{tpu_custom_call.1} parent=1 // pred_region
      %s41 = ssub.s32 64, 64
      %42 = vsyncadd [#allocation7], %s41
      %s44 = sshll.u32 [#allocation8], 4
      %s45 = int_to_ptr.vmem [resolvable:$true] %s44
      %47 = dma.hbm_to_vmem [thread:$0]  %s2, 64, %s45, [#allocation7]
    $region13: #{tpu_custom_call.1} parent=1 // pred_fallthru
      _
    // Predicated region
    $region14: #{tpu_custom_call.1} parent=1 // pred_check
      _
    $region15: #{tpu_custom_call.1} parent=1 // pred_check_branch
      %49 = sbr.rel (0) target = $region17
    $region16: #{tpu_custom_call.1} parent=1 // pred_region
      %s51 = ssub.s32 4096, 4096
      %52 = vsyncadd [#allocation10], %s51
      %s53 = sshll.u32 [#allocation9], 4
      %s54 = int_to_ptr.vmem [resolvable:$true] %s53
      %59 = dma.hbm_to_vmem [thread:$0]  %s3, 4096, %s54, [#allocation10], 64, 64, 4
    $region17: #{tpu_custom_call.1} parent=1 // pred_fallthru
      _
    // Predicated region
    $region18: #{tpu_custom_call.1} parent=1 // pred_check
      _
    $region19: #{tpu_custom_call.1} parent=1 // pred_check_branch
      %61 = sbr.rel (0) target = $region21
    $region20: #{tpu_custom_call.1} parent=1 // pred_region
      _
    $region21: #{tpu_custom_call.1} parent=1 // pred_fallthru
      _
    // Predicated region
    $region22: #{tpu_custom_call.1} parent=1 // pred_check
      _
    $region23: #{tpu_custom_call.1} parent=1 // pred_check_branch
      %63 = sbr.rel (0) target = $region25
    $region24: #{tpu_custom_call.1} parent=1 // pred_region
      %64 = dma.done [#allocation4], 256
    $region25: #{tpu_custom_call.1} parent=1 // pred_fallthru
      _
    // Predicated region
    $region26: #{tpu_custom_call.1} parent=1 // pred_check
      _
    $region27: #{tpu_custom_call.1} parent=1 // pred_check_branch
      %66 = sbr.rel (0) target = $region29
    $region28: #{tpu_custom_call.1} parent=1 // pred_region
      %67 = dma.done [#allocation7], 4096
    $region29: #{tpu_custom_call.1} parent=1 // pred_fallthru
      _
    // Predicated region
    $region30: #{tpu_custom_call.1} parent=1 // pred_check
      _
    $region31: #{tpu_custom_call.1} parent=1 // pred_check_branch
      %69 = sbr.rel (0) target = $region33
    $region32: #{tpu_custom_call.1} parent=1 // pred_region
      %70 = dma.done [#allocation7], 64
    $region33: #{tpu_custom_call.1} parent=1 // pred_fallthru
      _
    // Predicated region
    $region34: #{tpu_custom_call.1} parent=1 // pred_check
      _
    $region35: #{tpu_custom_call.1} parent=1 // pred_check_branch
      %72 = sbr.rel (0) target = $region37
    $region36: #{tpu_custom_call.1} parent=1 // pred_region
      %73 = dma.done [#allocation10], 4096
    $region37: #{tpu_custom_call.1} parent=1 // pred_fallthru
      _
    %p75 = scmp.eq.s32.totalorder 0, 0
    // Predicated region
    $region38: #{tpu_custom_call.1} parent=1 // pred_check
      %p76 = pneg %p75
    $region39: #{tpu_custom_call.1} parent=1 // pred_check_branch
      %78 = sbr.rel (%p76) target = $region41
    $region40: #{tpu_custom_call.1} parent=1 // pred_region
      %79 = vst [vmem:[#allocation2] sm:$0xff] 0.0
      %80 = vst [vmem:[#allocation2 + $0x8] sm:$0xff] 0.0
    $region41: #{tpu_custom_call.1} parent=1 // pred_fallthru
      _
    %v81 = vld [vmem:[#allocation3] sm:$0xff]
    %v82 = vld [vmem:[#allocation3 + $0x8] sm:$0xff]
    %v83 = vpack.c.bf16 %v82, %v81
    %v84 = vld [vmem:[#allocation6] sm:$0xff]
    %v85 = vld [vmem:[#allocation6 + $0x10] sm:$0xff]
    %v86 = vld [vmem:[#allocation6 + $0x20] sm:$0xff]
    %v87 = vld [vmem:[#allocation6 + $0x30] sm:$0xff]
    %v88 = vld [vmem:[#allocation6 + $0x40] sm:$0xff]
    %v89 = vld [vmem:[#allocation6 + $0x50] sm:$0xff]
    %v90 = vld [vmem:[#allocation6 + $0x60] sm:$0xff]
    %v91 = vld [vmem:[#allocation6 + $0x70] sm:$0xff]
    %v92 = vld [vmem:[#allocation6 + $0x80] sm:$0xff]
    %v93 = vld [vmem:[#allocation6 + $0x90] sm:$0xff]
    %v94 = vld [vmem:[#allocation6 + $0xa0] sm:$0xff]
    %v95 = vld [vmem:[#allocation6 + $0xb0] sm:$0xff]
    %v96 = vld [vmem:[#allocation6 + $0xc0] sm:$0xff]
    %v97 = vld [vmem:[#allocation6 + $0xd0] sm:$0xff]
    %v98 = vld [vmem:[#allocation6 + $0xe0] sm:$0xff]
    %v99 = vld [vmem:[#allocation6 + $0xf0] sm:$0xff]
    %v100 = vld [vmem:[#allocation8] sm:$0x3]
    %v102 = vlaneseq
    %v103 = vshrl.u32 %v102, 7
    %v104 = vsub.s32 0, %v103
    %v105 = vrot.slane %v100, %v104
    %v106 = vlaneseq
    %v107 = vshrl.u32 %v106, 7
    %v108 = vsub.s32 1, %v107
    %v109 = vrot.slane %v100, %v108
    %v128 = vunpack.c.l.b16 %v84
    %v129 = vunpack.c.h.b16 %v84
    %v130 = vunpack.c.l.b16 %v85
    %v131 = vunpack.c.h.b16 %v85
    %v132 = vunpack.c.l.b16 %v86
    %v133 = vunpack.c.h.b16 %v86
    %v134 = vunpack.c.l.b16 %v87
    %v135 = vunpack.c.h.b16 %v87
    %v136 = vunpack.c.l.b16 %v88
    %v137 = vunpack.c.h.b16 %v88
    %v138 = vunpack.c.l.b16 %v89
    %v139 = vunpack.c.h.b16 %v89
    %v140 = vunpack.c.l.b16 %v90
    %v141 = vunpack.c.h.b16 %v90
    %v142 = vunpack.c.l.b16 %v91
    %v143 = vunpack.c.h.b16 %v91
    %v144 = vunpack.c.l.b16 %v92
    %v145 = vunpack.c.h.b16 %v92
    %v146 = vunpack.c.l.b16 %v93
    %v147 = vunpack.c.h.b16 %v93
    %v148 = vunpack.c.l.b16 %v94
    %v149 = vunpack.c.h.b16 %v94
    %v150 = vunpack.c.l.b16 %v95
    %v151 = vunpack.c.h.b16 %v95
    %v152 = vunpack.c.l.b16 %v96
    %v153 = vunpack.c.h.b16 %v96
    %v154 = vunpack.c.l.b16 %v97
    %v155 = vunpack.c.h.b16 %v97
    %v156 = vunpack.c.l.b16 %v98
    %v157 = vunpack.c.h.b16 %v98
    %v158 = vunpack.c.l.b16 %v99
    %v159 = vunpack.c.h.b16 %v99
    %v160 = vpack.c.b16 %v130, %v128
    %v161 = vpack.c.b16 %v131, %v129
    %v162 = vpack.c.b16 %v134, %v132
    %v163 = vpack.c.b16 %v135, %v133
    %v164 = vpack.c.b16 %v138, %v136
    %v165 = vpack.c.b16 %v139, %v137
    %v166 = vpack.c.b16 %v142, %v140
    %v167 = vpack.c.b16 %v143, %v141
    %v168 = vpack.c.b16 %v146, %v144
    %v169 = vpack.c.b16 %v147, %v145
    %v170 = vpack.c.b16 %v150, %v148
    %v171 = vpack.c.b16 %v151, %v149
    %v172 = vpack.c.b16 %v154, %v152
    %v173 = vpack.c.b16 %v155, %v153
    %v174 = vpack.c.b16 %v158, %v156
    %v175 = vpack.c.b16 %v159, %v157
    %192 = vmatprep.subr.bf16.mxu0 %v175
    %193 = vmatpush1.bf16.msra.mxu0 %v174
    %194 = vmatprep.subr.bf16.mxu0 %v173
    %195 = vmatpush1.bf16.msra.mxu0 %v172
    %196 = vmatprep.subr.bf16.mxu0 %v171
    %197 = vmatpush1.bf16.msra.mxu0 %v170
    %198 = vmatprep.subr.bf16.mxu0 %v169
    %199 = vmatpush1.bf16.msra.mxu0 %v168
    %200 = vmatprep.subr.bf16.mxu0 %v167
    %201 = vmatpush1.bf16.msra.mxu0 %v166
    %202 = vmatprep.subr.bf16.mxu0 %v165
    %203 = vmatpush1.bf16.msra.mxu0 %v164
    %204 = vmatprep.subr.bf16.mxu0 %v163
    %205 = vmatpush1.bf16.msra.mxu0 %v162
    %206 = vmatprep.subr.bf16.mxu0 %v161
    %207 = vmatpush1.bf16.msra.mxu0 %v160
    %208 = vmatprep.subr.bf16.mxu0 0
    %209 = vmatpush2.bf16.msra.mxu0 0
    %210 = vmatprep.subr.bf16.mxu0 0
    %211 = vmatpush2.bf16.msra.mxu0 0
    %212 = vmatprep.subr.bf16.mxu0 0
    %213 = vmatpush2.bf16.msra.mxu0 0
    %214 = vmatprep.subr.bf16.mxu0 0
    %215 = vmatpush2.bf16.msra.mxu0 0
    %216 = vmatprep.subr.bf16.mxu0 0
    %217 = vmatpush2.bf16.msra.mxu0 0
    %218 = vmatprep.subr.bf16.mxu0 0
    %219 = vmatpush2.bf16.msra.mxu0 0
    %220 = vmatprep.subr.bf16.mxu0 0
    %221 = vmatpush2.bf16.msra.mxu0 0
    %222 = vmatprep.subr.bf16.mxu0 0
    %223 = vmatpush2.bf16.msra.mxu0 0
    %224 = vmatprep.mubr.bf16.mxu0 0
    %225 = vmatmul.mubr.bf16.gmra.mxu0 %v83
    %v226 = vpop.f32.mrf.mxu0
    %v227 = vadd.f32 %v105, %v226
    %v228 = vpop.f32.mrf.mxu0
    %v229 = vadd.f32 %v109, %v228
    %v230 = vpop.f32.mrf.mxu0
    %v231 = vadd.f32 %v105, %v230
    %v232 = vpop.f32.mrf.mxu0
    %v233 = vadd.f32 %v109, %v232
    %234 = vdwg.mxu0
    %v235 = vmul.f32 %v227, 0.5
    %v236 = vmul.f32 %v229, 0.5
    %v237 = vmul.f32 %v231, 0.5
    %v238 = vmul.f32 %v233, 0.5
    %v239 = vmul.f32 %v227, 0.70710677
    %v240 = vmul.f32 %v229, 0.70710677
    %v241 = vmul.f32 %v231, 0.70710677
    %v242 = vmul.f32 %v233, 0.70710677
    %v243 = verf.f32.pop %v239
    %v244 = verf.f32.pop %v240
    %v245 = verf.f32.pop %v241
    %v246 = verf.f32.pop %v242
    %v247 = vadd.f32 %v243, 1.0
    %v248 = vadd.f32 %v244, 1.0
    %v249 = vadd.f32 %v245, 1.0
    %v250 = vadd.f32 %v246, 1.0
    %v251 = vmul.f32 %v235, %v247
    %v252 = vmul.f32 %v236, %v248
    %v253 = vmul.f32 %v237, %v249
    %v254 = vmul.f32 %v238, %v250
    %v255 = vld [vmem:[#allocation2] sm:$0xff]
    %v256 = vld [vmem:[#allocation2 + $0x8] sm:$0xff]
    %v257 = vpack.c.bf16 %v253, %v251
    %v258 = vpack.c.bf16 %v254, %v252
    %v259 = vld [vmem:[#allocation9] sm:$0xf]
    %v260 = vld [vmem:[#allocation9 + $0x4] sm:$0xf]
    %v261 = vld [vmem:[#allocation9 + $0x8] sm:$0xf]
    %v262 = vld [vmem:[#allocation9 + $0xc] sm:$0xf]
    %v263 = vld [vmem:[#allocation9 + $0x10] sm:$0xf]
    %v264 = vld [vmem:[#allocation9 + $0x14] sm:$0xf]
    %v265 = vld [vmem:[#allocation9 + $0x18] sm:$0xf]
    %v266 = vld [vmem:[#allocation9 + $0x1c] sm:$0xf]
    %v267 = vld [vmem:[#allocation9 + $0x20] sm:$0xf]
    %v268 = vld [vmem:[#allocation9 + $0x24] sm:$0xf]
    %v269 = vld [vmem:[#allocation9 + $0x28] sm:$0xf]
    %v270 = vld [vmem:[#allocation9 + $0x2c] sm:$0xf]
    %v271 = vld [vmem:[#allocation9 + $0x30] sm:$0xf]
    %v272 = vld [vmem:[#allocation9 + $0x34] sm:$0xf]
    %v273 = vld [vmem:[#allocation9 + $0x38] sm:$0xf]
    %v274 = vld [vmem:[#allocation9 + $0x3c] sm:$0xf]
    %v275 = vld [vmem:[#allocation9 + $0x40] sm:$0xf]
    %v276 = vld [vmem:[#allocation9 + $0x44] sm:$0xf]
    %v277 = vld [vmem:[#allocation9 + $0x48] sm:$0xf]
    %v278 = vld [vmem:[#allocation9 + $0x4c] sm:$0xf]
    %v279 = vld [vmem:[#allocation9 + $0x50] sm:$0xf]
    %v280 = vld [vmem:[#allocation9 + $0x54] sm:$0xf]
    %v281 = vld [vmem:[#allocation9 + $0x58] sm:$0xf]
    %v282 = vld [vmem:[#allocation9 + $0x5c] sm:$0xf]
    %v283 = vld [vmem:[#allocation9 + $0x60] sm:$0xf]
    %v284 = vld [vmem:[#allocation9 + $0x64] sm:$0xf]
    %v285 = vld [vmem:[#allocation9 + $0x68] sm:$0xf]
    %v286 = vld [vmem:[#allocation9 + $0x6c] sm:$0xf]
    %v287 = vld [vmem:[#allocation9 + $0x70] sm:$0xf]
    %v288 = vld [vmem:[#allocation9 + $0x74] sm:$0xf]
    %v289 = vld [vmem:[#allocation9 + $0x78] sm:$0xf]
    %v290 = vld [vmem:[#allocation9 + $0x7c] sm:$0xf]
    %v323 = vunpack.c.l.b16 %v259
    %v324 = vunpack.c.l.b16 %v260
    %v325 = vunpack.c.l.b16 %v261
    %v326 = vunpack.c.l.b16 %v262
    %v327 = vunpack.c.l.b16 %v263
    %v328 = vunpack.c.l.b16 %v264
    %v329 = vunpack.c.l.b16 %v265
    %v330 = vunpack.c.l.b16 %v266
    %v331 = vunpack.c.l.b16 %v267
    %v332 = vunpack.c.l.b16 %v268
    %v333 = vunpack.c.l.b16 %v269
    %v334 = vunpack.c.l.b16 %v270
    %v335 = vunpack.c.l.b16 %v271
    %v336 = vunpack.c.l.b16 %v272
    %v337 = vunpack.c.l.b16 %v273
    %v338 = vunpack.c.l.b16 %v274
    %v339 = vunpack.c.l.b16 %v275
    %v340 = vunpack.c.l.b16 %v276
    %v341 = vunpack.c.l.b16 %v277
    %v342 = vunpack.c.l.b16 %v278
    %v343 = vunpack.c.l.b16 %v279
    %v344 = vunpack.c.l.b16 %v280
    %v345 = vunpack.c.l.b16 %v281
    %v346 = vunpack.c.l.b16 %v282
    %v347 = vunpack.c.l.b16 %v283
    %v348 = vunpack.c.l.b16 %v284
    %v349 = vunpack.c.l.b16 %v285
    %v350 = vunpack.c.l.b16 %v286
    %v351 = vunpack.c.l.b16 %v287
    %v352 = vunpack.c.l.b16 %v288
    %v353 = vunpack.c.l.b16 %v289
    %v354 = vunpack.c.l.b16 %v290
    %v355 = vpack.c.b16 %v324, %v323
    %v356 = vpack.c.b16 %v326, %v325
    %v357 = vpack.c.b16 %v328, %v327
    %v358 = vpack.c.b16 %v330, %v329
    %v359 = vpack.c.b16 %v332, %v331
    %v360 = vpack.c.b16 %v334, %v333
    %v361 = vpack.c.b16 %v336, %v335
    %v362 = vpack.c.b16 %v338, %v337
    %v363 = vpack.c.b16 %v340, %v339
    %v364 = vpack.c.b16 %v342, %v341
    %v365 = vpack.c.b16 %v344, %v343
    %v366 = vpack.c.b16 %v346, %v345
    %v367 = vpack.c.b16 %v348, %v347
    %v368 = vpack.c.b16 %v350, %v349
    %v369 = vpack.c.b16 %v352, %v351
    %v370 = vpack.c.b16 %v354, %v353
    %387 = vmatprep.subr.bf16.mxu0 0
    %388 = vmatpush1.bf16.msra.mxu0 %v362
    %389 = vmatprep.subr.bf16.mxu0 0
    %390 = vmatpush1.bf16.msra.mxu0 %v361
    %391 = vmatprep.subr.bf16.mxu0 0
    %392 = vmatpush1.bf16.msra.mxu0 %v360
    %393 = vmatprep.subr.bf16.mxu0 0
    %394 = vmatpush1.bf16.msra.mxu0 %v359
    %395 = vmatprep.subr.bf16.mxu0 0
    %396 = vmatpush1.bf16.msra.mxu0 %v358
    %397 = vmatprep.subr.bf16.mxu0 0
    %398 = vmatpush1.bf16.msra.mxu0 %v357
    %399 = vmatprep.subr.bf16.mxu0 0
    %400 = vmatpush1.bf16.msra.mxu0 %v356
    %401 = vmatprep.subr.bf16.mxu0 0
    %402 = vmatpush1.bf16.msra.mxu0 %v355
    %403 = vmatprep.subr.bf16.mxu0 0
    %404 = vmatpush2.bf16.msra.mxu0 %v370
    %405 = vmatprep.subr.bf16.mxu0 0
    %406 = vmatpush2.bf16.msra.mxu0 %v369
    %407 = vmatprep.subr.bf16.mxu0 0
    %408 = vmatpush2.bf16.msra.mxu0 %v368
    %409 = vmatprep.subr.bf16.mxu0 0
    %410 = vmatpush2.bf16.msra.mxu0 %v367
    %411 = vmatprep.subr.bf16.mxu0 0
    %412 = vmatpush2.bf16.msra.mxu0 %v366
    %413 = vmatprep.subr.bf16.mxu0 0
    %414 = vmatpush2.bf16.msra.mxu0 %v365
    %415 = vmatprep.subr.bf16.mxu0 0
    %416 = vmatpush2.bf16.msra.mxu0 %v364
    %417 = vmatprep.subr.bf16.mxu0 0
    %418 = vmatpush2.bf16.msra.mxu0 %v363
    %419 = vmatprep.mubr.bf16.mxu0 %v258
    %420 = vmatmul.mubr.bf16.gmra.mxu0 %v257
    %v421 = vpop.f32.mrf.mxu0
    %v422 = vadd.f32 0.0, %v421
    %v423 = vpop.f32.mrf.mxu0
    %v424 = vpop.f32.mrf.mxu0
    %v425 = vadd.f32 0.0, %v424
    %v426 = vpop.f32.mrf.mxu0
    %427 = vdwg.mxu0
    %v428 = vadd.f32 %v255, %v422
    %v429 = vadd.f32 %v256, %v425
    %430 = vst [vmem:[#allocation2] sm:$0xff] %v428
    %431 = vst [vmem:[#allocation2 + $0x8] sm:$0xff] %v429
    %v432 = vld [vmem:[#allocation6 + $0x8] sm:$0xff]
    %v433 = vld [vmem:[#allocation6 + $0x18] sm:$0xff]
    %v434 = vld [vmem:[#allocation6 + $0x28] sm:$0xff]
    %v435 = vld [vmem:[#allocation6 + $0x38] sm:$0xff]
    %v436 = vld [vmem:[#allocation6 + $0x48] sm:$0xff]
    %v437 = vld [vmem:[#allocation6 + $0x58] sm:$0xff]
    %v438 = vld [vmem:[#allocation6 + $0x68] sm:$0xff]
    %v439 = vld [vmem:[#allocation6 + $0x78] sm:$0xff]
    %v440 = vld [vmem:[#allocation6 + $0x88] sm:$0xff]
    %v441 = vld [vmem:[#allocation6 + $0x98] sm:$0xff]
    %v442 = vld [vmem:[#allocation6 + $0xa8] sm:$0xff]
    %v443 = vld [vmem:[#allocation6 + $0xb8] sm:$0xff]
    %v444 = vld [vmem:[#allocation6 + $0xc8] sm:$0xff]
    %v445 = vld [vmem:[#allocation6 + $0xd8] sm:$0xff]
    %v446 = vld [vmem:[#allocation6 + $0xe8] sm:$0xff]
    %v447 = vld [vmem:[#allocation6 + $0xf8] sm:$0xff]
    %v448 = vld [vmem:[#allocation8 + $0x2] sm:$0x3]
    %v450 = vlaneseq
    %v451 = vshrl.u32 %v450, 7
    %v452 = vsub.s32 0, %v451
    %v453 = vrot.slane %v448, %v452
    %v454 = vlaneseq
    %v455 = vshrl.u32 %v454, 7
    %v456 = vsub.s32 1, %v455
    %v457 = vrot.slane %v448, %v456
    %v476 = vunpack.c.l.b16 %v432
    %v477 = vunpack.c.h.b16 %v432
    %v478 = vunpack.c.l.b16 %v433
    %v479 = vunpack.c.h.b16 %v433
    %v480 = vunpack.c.l.b16 %v434
    %v481 = vunpack.c.h.b16 %v434
    %v482 = vunpack.c.l.b16 %v435
    %v483 = vunpack.c.h.b16 %v435
    %v484 = vunpack.c.l.b16 %v436
    %v485 = vunpack.c.h.b16 %v436
    %v486 = vunpack.c.l.b16 %v437
    %v487 = vunpack.c.h.b16 %v437
    %v488 = vunpack.c.l.b16 %v438
    %v489 = vunpack.c.h.b16 %v438
    %v490 = vunpack.c.l.b16 %v439
    %v491 = vunpack.c.h.b16 %v439
    %v492 = vunpack.c.l.b16 %v440
    %v493 = vunpack.c.h.b16 %v440
    %v494 = vunpack.c.l.b16 %v441
    %v495 = vunpack.c.h.b16 %v441
    %v496 = vunpack.c.l.b16 %v442
    %v497 = vunpack.c.h.b16 %v442
    %v498 = vunpack.c.l.b16 %v443
    %v499 = vunpack.c.h.b16 %v443
    %v500 = vunpack.c.l.b16 %v444
    %v501 = vunpack.c.h.b16 %v444
    %v502 = vunpack.c.l.b16 %v445
    %v503 = vunpack.c.h.b16 %v445
    %v504 = vunpack.c.l.b16 %v446
    %v505 = vunpack.c.h.b16 %v446
    %v506 = vunpack.c.l.b16 %v447
    %v507 = vunpack.c.h.b16 %v447
    %v508 = vpack.c.b16 %v478, %v476
    %v509 = vpack.c.b16 %v479, %v477
    %v510 = vpack.c.b16 %v482, %v480
    %v511 = vpack.c.b16 %v483, %v481
    %v512 = vpack.c.b16 %v486, %v484
    %v513 = vpack.c.b16 %v487, %v485
    %v514 = vpack.c.b16 %v490, %v488
    %v515 = vpack.c.b16 %v491, %v489
    %v516 = vpack.c.b16 %v494, %v492
    %v517 = vpack.c.b16 %v495, %v493
    %v518 = vpack.c.b16 %v498, %v496
    %v519 = vpack.c.b16 %v499, %v497
    %v520 = vpack.c.b16 %v502, %v500
    %v521 = vpack.c.b16 %v503, %v501
    %v522 = vpack.c.b16 %v506, %v504
    %v523 = vpack.c.b16 %v507, %v505
    %540 = vmatprep.subr.bf16.mxu0 %v523
    %541 = vmatpush1.bf16.msra.mxu0 %v522
    %542 = vmatprep.subr.bf16.mxu0 %v521
    %543 = vmatpush1.bf16.msra.mxu0 %v520
    %544 = vmatprep.subr.bf16.mxu0 %v519
    %545 = vmatpush1.bf16.msra.mxu0 %v518
    %546 = vmatprep.subr.bf16.mxu0 %v517
    %547 = vmatpush1.bf16.msra.mxu0 %v516
    %548 = vmatprep.subr.bf16.mxu0 %v515
    %549 = vmatpush1.bf16.msra.mxu0 %v514
    %550 = vmatprep.subr.bf16.mxu0 %v513
    %551 = vmatpush1.bf16.msra.mxu0 %v512
    %552 = vmatprep.subr.bf16.mxu0 %v511
    %553 = vmatpush1.bf16.msra.mxu0 %v510
    %554 = vmatprep.subr.bf16.mxu0 %v509
    %555 = vmatpush1.bf16.msra.mxu0 %v508
    %556 = vmatprep.subr.bf16.mxu0 0
    %557 = vmatpush2.bf16.msra.mxu0 0
    %558 = vmatprep.subr.bf16.mxu0 0
    %559 = vmatpush2.bf16.msra.mxu0 0
    %560 = vmatprep.subr.bf16.mxu0 0
    %561 = vmatpush2.bf16.msra.mxu0 0
    %562 = vmatprep.subr.bf16.mxu0 0
    %563 = vmatpush2.bf16.msra.mxu0 0
    %564 = vmatprep.subr.bf16.mxu0 0
    %565 = vmatpush2.bf16.msra.mxu0 0
    %566 = vmatprep.subr.bf16.mxu0 0
    %567 = vmatpush2.bf16.msra.mxu0 0
    %568 = vmatprep.subr.bf16.mxu0 0
    %569 = vmatpush2.bf16.msra.mxu0 0
    %570 = vmatprep.subr.bf16.mxu0 0
    %571 = vmatpush2.bf16.msra.mxu0 0
    %572 = vmatprep.mubr.bf16.mxu0 0
    %573 = vmatmul.mubr.bf16.gmra.mxu0 %v83
    %v574 = vpop.f32.mrf.mxu0
    %v575 = vadd.f32 %v453, %v574
    %v576 = vpop.f32.mrf.mxu0
    %v577 = vadd.f32 %v457, %v576
    %v578 = vpop.f32.mrf.mxu0
    %v579 = vadd.f32 %v453, %v578
    %v580 = vpop.f32.mrf.mxu0
    %v581 = vadd.f32 %v457, %v580
    %582 = vdwg.mxu0
    %v583 = vmul.f32 %v575, 0.5
    %v584 = vmul.f32 %v577, 0.5
    %v585 = vmul.f32 %v579, 0.5
    %v586 = vmul.f32 %v581, 0.5
    %v587 = vmul.f32 %v575, 0.70710677
    %v588 = vmul.f32 %v577, 0.70710677
    %v589 = vmul.f32 %v579, 0.70710677
    %v590 = vmul.f32 %v581, 0.70710677
    %v591 = verf.f32.pop %v587
    %v592 = verf.f32.pop %v588
    %v593 = verf.f32.pop %v589
    %v594 = verf.f32.pop %v590
    %v595 = vadd.f32 %v591, 1.0
    %v596 = vadd.f32 %v592, 1.0
    %v597 = vadd.f32 %v593, 1.0
    %v598 = vadd.f32 %v594, 1.0
    %v599 = vmul.f32 %v583, %v595
    %v600 = vmul.f32 %v584, %v596
    %v601 = vmul.f32 %v585, %v597
    %v602 = vmul.f32 %v586, %v598
    %v603 = vld [vmem:[#allocation2] sm:$0xff]
    %v604 = vld [vmem:[#allocation2 + $0x8] sm:$0xff]
    %v605 = vpack.c.bf16 %v601, %v599
    %v606 = vpack.c.bf16 %v602, %v600
    %v607 = vld [vmem:[#allocation9 + $0x80] sm:$0xf]
    %v608 = vld [vmem:[#allocation9 + $0x84] sm:$0xf]
    %v609 = vld [vmem:[#allocation9 + $0x88] sm:$0xf]
    %v610 = vld [vmem:[#allocation9 + $0x8c] sm:$0xf]
    %v611 = vld [vmem:[#allocation9 + $0x90] sm:$0xf]
    %v612 = vld [vmem:[#allocation9 + $0x94] sm:$0xf]
    %v613 = vld [vmem:[#allocation9 + $0x98] sm:$0xf]
    %v614 = vld [vmem:[#allocation9 + $0x9c] sm:$0xf]
    %v615 = vld [vmem:[#allocation9 + $0xa0] sm:$0xf]
    %v616 = vld [vmem:[#allocation9 + $0xa4] sm:$0xf]
    %v617 = vld [vmem:[#allocation9 + $0xa8] sm:$0xf]
    %v618 = vld [vmem:[#allocation9 + $0xac] sm:$0xf]
    %v619 = vld [vmem:[#allocation9 + $0xb0] sm:$0xf]
    %v620 = vld [vmem:[#allocation9 + $0xb4] sm:$0xf]
    %v621 = vld [vmem:[#allocation9 + $0xb8] sm:$0xf]
    %v622 = vld [vmem:[#allocation9 + $0xbc] sm:$0xf]
    %v623 = vld [vmem:[#allocation9 + $0xc0] sm:$0xf]
    %v624 = vld [vmem:[#allocation9 + $0xc4] sm:$0xf]
    %v625 = vld [vmem:[#allocation9 + $0xc8] sm:$0xf]
    %v626 = vld [vmem:[#allocation9 + $0xcc] sm:$0xf]
    %v627 = vld [vmem:[#allocation9 + $0xd0] sm:$0xf]
    %v628 = vld [vmem:[#allocation9 + $0xd4] sm:$0xf]
    %v629 = vld [vmem:[#allocation9 + $0xd8] sm:$0xf]
    %v630 = vld [vmem:[#allocation9 + $0xdc] sm:$0xf]
    %v631 = vld [vmem:[#allocation9 + $0xe0] sm:$0xf]
    %v632 = vld [vmem:[#allocation9 + $0xe4] sm:$0xf]
    %v633 = vld [vmem:[#allocation9 + $0xe8] sm:$0xf]
    %v634 = vld [vmem:[#allocation9 + $0xec] sm:$0xf]
    %v635 = vld [vmem:[#allocation9 + $0xf0] sm:$0xf]
    %v636 = vld [vmem:[#allocation9 + $0xf4] sm:$0xf]
    %v637 = vld [vmem:[#allocation9 + $0xf8] sm:$0xf]
    %v638 = vld [vmem:[#allocation9 + $0xfc] sm:$0xf]
    %v671 = vunpack.c.l.b16 %v607
    %v672 = vunpack.c.l.b16 %v608
    %v673 = vunpack.c.l.b16 %v609
    %v674 = vunpack.c.l.b16 %v610
    %v675 = vunpack.c.l.b16 %v611
    %v676 = vunpack.c.l.b16 %v612
    %v677 = vunpack.c.l.b16 %v613
    %v678 = vunpack.c.l.b16 %v614
    %v679 = vunpack.c.l.b16 %v615
    %v680 = vunpack.c.l.b16 %v616
    %v681 = vunpack.c.l.b16 %v617
    %v682 = vunpack.c.l.b16 %v618
    %v683 = vunpack.c.l.b16 %v619
    %v684 = vunpack.c.l.b16 %v620
    %v685 = vunpack.c.l.b16 %v621
    %v686 = vunpack.c.l.b16 %v622
    %v687 = vunpack.c.l.b16 %v623
    %v688 = vunpack.c.l.b16 %v624
    %v689 = vunpack.c.l.b16 %v625
    %v690 = vunpack.c.l.b16 %v626
    %v691 = vunpack.c.l.b16 %v627
    %v692 = vunpack.c.l.b16 %v628
    %v693 = vunpack.c.l.b16 %v629
    %v694 = vunpack.c.l.b16 %v630
    %v695 = vunpack.c.l.b16 %v631
    %v696 = vunpack.c.l.b16 %v632
    %v697 = vunpack.c.l.b16 %v633
    %v698 = vunpack.c.l.b16 %v634
    %v699 = vunpack.c.l.b16 %v635
    %v700 = vunpack.c.l.b16 %v636
    %v701 = vunpack.c.l.b16 %v637
    %v702 = vunpack.c.l.b16 %v638
    %v703 = vpack.c.b16 %v672, %v671
    %v704 = vpack.c.b16 %v674, %v673
    %v705 = vpack.c.b16 %v676, %v675
    %v706 = vpack.c.b16 %v678, %v677
    %v707 = vpack.c.b16 %v680, %v679
    %v708 = vpack.c.b16 %v682, %v681
    %v709 = vpack.c.b16 %v684, %v683
    %v710 = vpack.c.b16 %v686, %v685
    %v711 = vpack.c.b16 %v688, %v687
    %v712 = vpack.c.b16 %v690, %v689
    %v713 = vpack.c.b16 %v692, %v691
    %v714 = vpack.c.b16 %v694, %v693
    %v715 = vpack.c.b16 %v696, %v695
    %v716 = vpack.c.b16 %v698, %v697
    %v717 = vpack.c.b16 %v700, %v699
    %v718 = vpack.c.b16 %v702, %v701
    %735 = vmatprep.subr.bf16.mxu0 0
    %736 = vmatpush1.bf16.msra.mxu0 %v710
    %737 = vmatprep.subr.bf16.mxu0 0
    %738 = vmatpush1.bf16.msra.mxu0 %v709
    %739 = vmatprep.subr.bf16.mxu0 0
    %740 = vmatpush1.bf16.msra.mxu0 %v708
    %741 = vmatprep.subr.bf16.mxu0 0
    %742 = vmatpush1.bf16.msra.mxu0 %v707
    %743 = vmatprep.subr.bf16.mxu0 0
    %744 = vmatpush1.bf16.msra.mxu0 %v706
    %745 = vmatprep.subr.bf16.mxu0 0
    %746 = vmatpush1.bf16.msra.mxu0 %v705
    %747 = vmatprep.subr.bf16.mxu0 0
    %748 = vmatpush1.bf16.msra.mxu0 %v704
    %749 = vmatprep.subr.bf16.mxu0 0
    %750 = vmatpush1.bf16.msra.mxu0 %v703
    %751 = vmatprep.subr.bf16.mxu0 0
    %752 = vmatpush2.bf16.msra.mxu0 %v718
    %753 = vmatprep.subr.bf16.mxu0 0
    %754 = vmatpush2.bf16.msra.mxu0 %v717
    %755 = vmatprep.subr.bf16.mxu0 0
    %756 = vmatpush2.bf16.msra.mxu0 %v716
    %757 = vmatprep.subr.bf16.mxu0 0
    %758 = vmatpush2.bf16.msra.mxu0 %v715
    %759 = vmatprep.subr.bf16.mxu0 0
    %760 = vmatpush2.bf16.msra.mxu0 %v714
    %761 = vmatprep.subr.bf16.mxu0 0
    %762 = vmatpush2.bf16.msra.mxu0 %v713
    %763 = vmatprep.subr.bf16.mxu0 0
    %764 = vmatpush2.bf16.msra.mxu0 %v712
    %765 = vmatprep.subr.bf16.mxu0 0
    %766 = vmatpush2.bf16.msra.mxu0 %v711
    %767 = vmatprep.mubr.bf16.mxu0 %v606
    %768 = vmatmul.mubr.bf16.gmra.mxu0 %v605
    %v769 = vpop.f32.mrf.mxu0
    %v770 = vadd.f32 0.0, %v769
    %v771 = vpop.f32.mrf.mxu0
    %v772 = vpop.f32.mrf.mxu0
    %v773 = vadd.f32 0.0, %v772
    %v774 = vpop.f32.mrf.mxu0
    %775 = vdwg.mxu0
    %v776 = vadd.f32 %v603, %v770
    %v777 = vadd.f32 %v604, %v773
    %778 = vst [vmem:[#allocation2] sm:$0xff] %v776
    %779 = vst [vmem:[#allocation2 + $0x8] sm:$0xff] %v777
    // Predicated region
    $region42: #{tpu_custom_call.1} parent=1 // pred_check
      %p780 = pneg %p75
    $region43: #{tpu_custom_call.1} parent=1 // pred_check_branch
      %782 = sbr.rel (%p780) target = $region45
    $region44: #{tpu_custom_call.1} parent=1 // pred_region
      %v783 = vld [vmem:[#allocation2] sm:$0xff]
      %v784 = vld [vmem:[#allocation2 + $0x8] sm:$0xff]
      %v785 = vld [vmem:[%s4] sm:$0x1]
      %v787 = vlaneseq
      %v788 = vshrl.u32 %v787, 7
      %v789 = vsub.s32 0, %v788
      %v790 = vrot.slane %v785, %v789
      %v792 = vadd.f32 %v783, %v790
      %v793 = vadd.f32 %v784, %v790
      %794 = vst [vmem:[#allocation11] sm:$0xff] %v792
      %795 = vst [vmem:[#allocation11 + $0x8] sm:$0xff] %v793
    $region45: #{tpu_custom_call.1} parent=1 // pred_fallthru
      _
    // Predicated region
    $region46: #{tpu_custom_call.1} parent=1 // pred_check
      _
    $region47: #{tpu_custom_call.1} parent=1 // pred_check_branch
      %797 = sbr.rel (0) target = $region49
    $region48: #{tpu_custom_call.1} parent=1 // pred_region
      %s799 = ssub.s32 256, 256
      %800 = vsyncadd [#allocation5], %s799
      %s801 = sshll.u32 [#allocation11], 4
      %s802 = int_to_ptr.vmem [resolvable:$true] %s801
      %807 = dma.vmem_to_hbm [thread:$0]  %s802, 256, %s5, [#allocation5], 128, 128, 8
    $region49: #{tpu_custom_call.1} parent=1 // pred_fallthru
      _
    // Predicated region
    $region50: #{tpu_custom_call.1} parent=1 // pred_check
      _
    $region51: #{tpu_custom_call.1} parent=1 // pred_check_branch
      %809 = sbr.rel (0) target = $region53
    $region52: #{tpu_custom_call.1} parent=1 // pred_region
      %810 = dma.done [#allocation5], 256
    $region53: #{tpu_custom_call.1} parent=1 // pred_fallthru
      _
    %811 = vsyncpa [#allocation4], 1
    %812 = vsyncpa [#allocation7], 1
    %813 = vsyncpa [#allocation10], 1
    %814 = vsyncpa [#allocation5], 1

</llo_original>
